<compile_context>
chip_gen: v7x
topology: tpu7x:2x2x1
jax: 0.10.0
libtpu: 0.0.40
codegen_flags: <defaults>
</compile_context>

<pallas_src>
import functools

import jax
import jax.numpy as jnp
from jax import lax
from jax.experimental import pallas as pl
from jax.experimental.pallas import tpu as pltpu


LRELU_SLOPE = 0.1  # matches nn.LeakyReLU(0.1) in the reference module


def _round_up(x, m):
    return ((x + m - 1) // m) * m


def _leaky(x):
    return jnp.where(x >= 0, x, LRELU_SLOPE * x)


# ----------------------------------------------------------------------------
# Fused Pallas kernel: one dilation stage of the ResBlock
#   out = conv2(lrelu(conv1(lrelu(x)))) + x     (both convs "same"-padded)
# ----------------------------------------------------------------------------
def _fused_stage_kernel(xpad_ref, w1_ref, b1_ref, w2_ref, b2_ref,   # inputs
                        out_ref,                                     # output
                        win_ref, sem_ref, acc_ref,                   # scratch
                        *, dilation, k_taps, tile_t, halo, t_len):
    b = pl.program_id(0)
    i = pl.program_id(1)
    n_t = pl.num_programs(1)

    d = dilation
    pad = d * (k_taps - 1) // 2          # per-conv "same" padding
    win = tile_t + 2 * halo              # rows DMA'd per tile
    l1 = tile_t + 2 * pad                # conv1 rows needed as conv2 context

    def window_copy(tile_idx, slot):
        start = tile_idx * tile_t
        return pltpu.make_async_copy(
            xpad_ref.at[b, pl.ds(start, win), :],
            win_ref.at[slot],
            sem_ref.at[slot])

    slot = lax.rem(i, 2)

    # Prime the double buffer at the first tile of this batch row.
    @pl.when(i == 0)
    def _():
        window_copy(0, 0).start()

    # Wait for the current window, then prefetch the next one (overlaps
    # with this tile's compute).
    window_copy(i, slot).wait()

    @pl.when(i + 1 < n_t)
    def _():
        window_copy(i + 1, 1 - slot).start()

    x_win = win_ref[slot]                                   # (win, C)
    a1 = _leaky(x_win)

    # ---- conv1 (dilated), bias folded into the init ----------------------
    base = halo - 2 * pad                                   # >= 0 by construction
    y1 = b1_ref[...].astype(jnp.float32)                    # (1, C) broadcasts
    for k in range(k_taps):                                 # static, unrolled
        off = base + k * d
        y1 = y1 + jnp.dot(a1[off:off + l1, :], w1_ref[k],
                          preferred_element_type=jnp.float32)

    a2 = _leaky(y1)                                         # (l1, C)

    # conv2 must see zeros outside the valid [0, t_len) range (the original
    # module zero-pads the length-T conv1 output), so mask by global row.
    g1 = i * tile_t - pad + lax.broadcasted_iota(jnp.int32, (l1, 1), 0)
    a2 = jnp.where((g1 >= 0) & (g1 < t_len), a2, 0.0)

    # ---- conv2 + residual: accumulate in VMEM scratch, bias+res as init --
    res = x_win[halo:halo + tile_t, :]                      # pre-activation x
    acc_ref[...] = res.astype(jnp.float32) + b2_ref[...]
    for k in range(k_taps):
        off = k * d
        acc_ref[...] += jnp.dot(a2[off:off + tile_t, :], w2_ref[k],
                                preferred_element_type=jnp.float32)

    # Zero rows past the true signal length so later stages see clean padding.
    g2 = i * tile_t + lax.broadcasted_iota(jnp.int32, (tile_t, 1), 0)
    out_ref[0] = jnp.where(g2 < t_len, acc_ref[...], 0.0).astype(out_ref.dtype)


def _fused_stage(x_ntc, w1, b1, w2, b2, dilation, tile_t, t_len):
    """One dilation stage. x_ntc: (B, Tt, Cp), channel-padded, Tt % tile_t == 0."""
    B, Tt, Cp = x_ntc.shape
    K = w1.shape[0]
    halo = _round_up(dilation * (K - 1), 8)      # covers both convs' context
    win = tile_t + 2 * halo
    n_t = Tt // tile_t

    xpad = jnp.pad(x_ntc, ((0, 0), (halo, halo), (0, 0)))   # one pad per stage

    kernel = functools.partial(
        _fused_stage_kernel, dilation=dilation, k_taps=K,
        tile_t=tile_t, halo=halo, t_len=t_len)

    grid_spec = pltpu.PrefetchScalarGridSpec(
        num_scalar_prefetch=0,
        grid=(B, n_t),
        in_specs=[
            pl.BlockSpec(memory_space=pl.ANY),                # x stays in HBM; manual DMA
            pl.BlockSpec((K, Cp, Cp), lambda b, i: (0, 0, 0)),
            pl.BlockSpec((1, Cp), lambda b, i: (0, 0)),
            pl.BlockSpec((K, Cp, Cp), lambda b, i: (0, 0, 0)),
            pl.BlockSpec((1, Cp), lambda b, i: (0, 0)),
        ],
        out_specs=pl.BlockSpec((1, tile_t, Cp), lambda b, i: (b, i, 0)),
        scratch_shapes=[
            pltpu.VMEM((2, win, Cp), x_ntc.dtype),            # double-buffered window
            pltpu.SemaphoreType.DMA((2,)),
            pltpu.VMEM((tile_t, Cp), jnp.float32),            # conv2 accumulator
        ],
    )

    return pl.pallas_call(
        kernel,
        out_shape=jax.ShapeDtypeStruct((B, Tt, Cp), x_ntc.dtype),
        grid_spec=grid_spec,
        compiler_params=pltpu.CompilerParams(
            dimension_semantics=("parallel", "arbitrary")),
    )(xpad, w1, b1, w2, b2)


# ----------------------------------------------------------------------------
# ResBlock forward (parameters in PyTorch layout; hot path in Pallas)
# ----------------------------------------------------------------------------
def resblock_forward(x_nct, params, dilations=(1, 3, 5), tile_t=None):
    """x_nct: (B, C, T) like PyTorch; returns (B, C, T)."""
    B, C, T = x_nct.shape
    Cp = _round_up(C, 128)                 # lane-dense channels

    # Time tile: pick the biggest that comfortably fits VMEM.
    # v5e/v6e (128 MiB VMEM): ~2048-4096 rows at C=512; v7x (64 MiB): ~half.
    if tile_t is None:
        tile_t = 512
    tile_t = min(_round_up(tile_t, 8), _round_up(T, 8))
    Tt = _round_up(T, tile_t)

    x = jnp.transpose(x_nct, (0, 2, 1))                        # -> (B, T, C)
    x = jnp.pad(x, ((0, 0), (0, Tt - T), (0, Cp - C)))         # pad time & lanes once

    def _prep(w_pt, bias):
        # PyTorch (C_out, C_in, K) -> tap-major (K, C_in, C_out), zero-padded to Cp.
        K = w_pt.shape[-1]
        assert K % 2 == 1, "ResBlock 'same' padding assumes odd kernel_size"
        w = jnp.transpose(w_pt, (2, 1, 0))
        w = jnp.pad(w, ((0, 0), (0, Cp - C), (0, Cp - C))).astype(x_nct.dtype)
        b2 = jnp.pad(bias, (0, Cp - C)).reshape(1, Cp).astype(x_nct.dtype)
        return w, b2

    for i, d in enumerate(dilations):
        w1, b1 = _prep(*params["convs1"][i])
        w2, b2 = _prep(*params["convs2"][i])
        x = _fused_stage(x, w1, b1, w2, b2, d, tile_t, T)

    return jnp.transpose(x[:, :T, :C], (0, 2, 1))              # -> (B, C, T)


# ----------------------------------------------------------------------------
# Deterministic parameter init (PyTorch Conv1d layout and init scheme)
# ----------------------------------------------------------------------------
def init_resblock_params(key, channels, kernel_size, dilations=(1, 3, 5)):
    bound = 1.0 / (channels * kernel_size) ** 0.5
    params = {"convs1": [], "convs2": []}
    for name in ("convs1", "convs2"):
        for _ in dilations:
            key, kw, kb = jax.random.split(key, 3)
            w = jax.random.uniform(kw, (channels, channels, kernel_size),
                                   jnp.float32, -bound, bound)   # (C_out, C_in, K)
            b = jax.random.uniform(kb, (channels,), jnp.float32, -bound, bound)
            params[name].append((w, b))
    return params


# ----------------------------------------------------------------------------
# Pure-JAX reference (for correctness check)
# ----------------------------------------------------------------------------
def _conv1d_ref(x_ntc, w_pt, bias, dilation):
    K = w_pt.shape[-1]
    pad = dilation * (K - 1) // 2
    w_kio = jnp.transpose(w_pt, (2, 1, 0))
    y = lax.conv_general_dilated(
        x_ntc, w_kio, window_strides=(1,), padding=[(pad, pad)],
        rhs_dilation=(dilation,), dimension_numbers=("NWC", "WIO", "NWC"))
    return y + bias


def resblock_ref(x_nct, params, dilations=(1, 3, 5)):
    x = jnp.transpose(x_nct, (0, 2, 1))
    for i, d in enumerate(dilations):
        w1, b1 = params["convs1"][i]
        w2, b2 = params["convs2"][i]
        xt = _conv1d_ref(_leaky(x), w1, b1, d)
        xt = _conv1d_ref(_leaky(xt), w2, b2, d)
        x = xt + x
    return jnp.transpose(x, (0, 2, 1))


# ----------------------------------------------------------------------------
if __name__ == "__main__":
    B, C, T = 2, 8, 40
    kernel_size = 3
    dilations = (1, 3, 5)
    tile_t = 16   # small tile so the test exercises multi-tile, prefetch & tail mask

    key = jax.random.PRNGKey(0)
    key, kx = jax.random.split(key)
    x = jax.random.normal(kx, (B, C, T), jnp.float32)       # PyTorch NCT layout
    params = init_resblock_params(key, C, kernel_size, dilations)

    out = jax.block_until_ready(resblock_forward(x, params, dilations, tile_t=tile_t))
    ref = jax.block_until_ready(resblock_ref(x, params, dilations))

    assert out.shape == (B, C, T)
    assert jnp.allclose(out, ref, rtol=1e-4, atol=1e-4), "mismatch vs reference"

    print("KERNEL_OK")
</pallas_src>

<mosaic_0001>
module attributes {stable_mosaic.version = 11 : i64} {
  func.func @_fused_stage_kernel(%arg0: i32, %arg1: i32, %arg2: memref<2x64x128xf32, #tpu.memory_space<any>>, %arg3: memref<3x128x128xf32, #tpu.memory_space<vmem>>, %arg4: memref<1x128xf32, #tpu.memory_space<vmem>>, %arg5: memref<3x128x128xf32, #tpu.memory_space<vmem>>, %arg6: memref<1x128xf32, #tpu.memory_space<vmem>>, %arg7: memref<1x16x128xf32, #tpu.memory_space<vmem>>, %arg8: memref<2x32x128xf32, #tpu.memory_space<vmem>>, %arg9: memref<2x!tpu.dma_semaphore, #tpu.memory_space<semaphore_mem>>, %arg10: memref<16x128xf32, #tpu.memory_space<vmem>>) attributes {dimension_semantics = [#tpu.dimension_semantics<parallel>, #tpu.dimension_semantics<arbitrary>], iteration_bounds = array<i64: 2, 3>, scalar_prefetch = 0 : i64, scratch_operands = 3 : i64, tpu.core_type = #tpu.core_type<tc>, window_params = [{}, {pipeline_mode = #tpu.pipeline_mode<synchronous>, transform_indices = @transform_1, window_bounds = array<i64: 3, 128, 128>}, {pipeline_mode = #tpu.pipeline_mode<synchronous>, transform_indices = @transform_2, window_bounds = array<i64: 1, 128>}, {pipeline_mode = #tpu.pipeline_mode<synchronous>, transform_indices = @transform_3, window_bounds = array<i64: 3, 128, 128>}, {pipeline_mode = #tpu.pipeline_mode<synchronous>, transform_indices = @transform_4, window_bounds = array<i64: 1, 128>}, {transform_indices = @transform_5, window_bounds = array<i64: 1, 16, 128>}]} {
    %c2_i32 = arith.constant 2 : i32
    %0 = arith.remsi %arg1, %c2_i32 : i32
    %c0_i32 = arith.constant 0 : i32
    %1 = arith.cmpi eq, %arg1, %c0_i32 : i32
    %2 = arith.extui %1 : i1 to i32
    %c0_i32_0 = arith.constant 0 : i32
    %3 = arith.cmpi ne, %2, %c0_i32_0 : i32
    scf.if %3 {
      %c0_i32_61 = arith.constant 0 : i32
      %c0_i32_62 = arith.constant 0 : i32
      %c0_i32_63 = arith.constant 0 : i32
      %c0_i32_64 = arith.constant 0 : i32
      %99 = tpu.memref_slice %arg2[%arg0, %c0_i32_63, %c0_i32_64] : memref<2x64x128xf32, #tpu.memory_space<any>> -> memref<1x32x128xf32, #tpu.memory_space<any>>
      %100 = tpu.memref_squeeze %99 : memref<1x32x128xf32, #tpu.memory_space<any>> -> memref<32x128xf32, #tpu.memory_space<any>>
      %c0_i32_65 = arith.constant 0 : i32
      %c0_i32_66 = arith.constant 0 : i32
      %101 = tpu.memref_slice %arg8[%c0_i32_61, %c0_i32_65, %c0_i32_66] : memref<2x32x128xf32, #tpu.memory_space<vmem>> -> memref<1x32x128xf32, #tpu.memory_space<vmem>>
      %102 = tpu.memref_squeeze %101 : memref<1x32x128xf32, #tpu.memory_space<vmem>> -> memref<32x128xf32, #tpu.memory_space<vmem>>
      %103 = tpu.memref_slice %arg9[%c0_i32_62] : memref<2x!tpu.dma_semaphore, #tpu.memory_space<semaphore_mem>> -> memref<1x!tpu.dma_semaphore, #tpu.memory_space<semaphore_mem>>
      %104 = tpu.memref_squeeze %103 : memref<1x!tpu.dma_semaphore, #tpu.memory_space<semaphore_mem>> -> memref<!tpu.dma_semaphore, #tpu.memory_space<semaphore_mem>>
      tpu.enqueue_dma source(%100 : memref<32x128xf32, #tpu.memory_space<any>>) target(%102 : memref<32x128xf32, #tpu.memory_space<vmem>>) target_semaphore(%104 : memref<!tpu.dma_semaphore, #tpu.memory_space<semaphore_mem>>)
    } else {
    }
    %c16_i32 = arith.constant 16 : i32
    %4 = arith.muli %arg1, %c16_i32 : i32
    %c0_i32_1 = arith.constant 0 : i32
    %5 = tpu.memref_slice %arg2[%arg0, %4, %c0_i32_1] : memref<2x64x128xf32, #tpu.memory_space<any>> -> memref<1x32x128xf32, #tpu.memory_space<any>>
    %6 = tpu.memref_squeeze %5 : memref<1x32x128xf32, #tpu.memory_space<any>> -> memref<32x128xf32, #tpu.memory_space<any>>
    %c0_i32_2 = arith.constant 0 : i32
    %c0_i32_3 = arith.constant 0 : i32
    %7 = tpu.memref_slice %arg8[%0, %c0_i32_2, %c0_i32_3] : memref<2x32x128xf32, #tpu.memory_space<vmem>> -> memref<1x32x128xf32, #tpu.memory_space<vmem>>
    %8 = tpu.memref_squeeze %7 : memref<1x32x128xf32, #tpu.memory_space<vmem>> -> memref<32x128xf32, #tpu.memory_space<vmem>>
    %9 = tpu.memref_slice %arg9[%0] : memref<2x!tpu.dma_semaphore, #tpu.memory_space<semaphore_mem>> -> memref<1x!tpu.dma_semaphore, #tpu.memory_space<semaphore_mem>>
    %10 = tpu.memref_squeeze %9 : memref<1x!tpu.dma_semaphore, #tpu.memory_space<semaphore_mem>> -> memref<!tpu.dma_semaphore, #tpu.memory_space<semaphore_mem>>
    tpu.wait_dma2 semaphore(%10 : memref<!tpu.dma_semaphore, #tpu.memory_space<semaphore_mem>>) src(%6 : memref<32x128xf32, #tpu.memory_space<any>>) dst(%8 : memref<32x128xf32, #tpu.memory_space<vmem>>)
    %c1_i32 = arith.constant 1 : i32
    %11 = arith.addi %arg1, %c1_i32 : i32
    %c3_i32 = arith.constant 3 : i32
    %12 = arith.cmpi slt, %11, %c3_i32 : i32
    %13 = arith.extui %12 : i1 to i32
    %c0_i32_4 = arith.constant 0 : i32
    %14 = arith.cmpi ne, %13, %c0_i32_4 : i32
    scf.if %14 {
      %c1_i32_61 = arith.constant 1 : i32
      %99 = arith.addi %arg1, %c1_i32_61 : i32
      %c1_i32_62 = arith.constant 1 : i32
      %100 = arith.subi %c1_i32_62, %0 : i32
      %c16_i32_63 = arith.constant 16 : i32
      %101 = arith.muli %99, %c16_i32_63 : i32
      %c0_i32_64 = arith.constant 0 : i32
      %102 = tpu.memref_slice %arg2[%arg0, %101, %c0_i32_64] : memref<2x64x128xf32, #tpu.memory_space<any>> -> memref<1x32x128xf32, #tpu.memory_space<any>>
      %103 = tpu.memref_squeeze %102 : memref<1x32x128xf32, #tpu.memory_space<any>> -> memref<32x128xf32, #tpu.memory_space<any>>
      %c0_i32_65 = arith.constant 0 : i32
      %c0_i32_66 = arith.constant 0 : i32
      %104 = tpu.memref_slice %arg8[%100, %c0_i32_65, %c0_i32_66] : memref<2x32x128xf32, #tpu.memory_space<vmem>> -> memref<1x32x128xf32, #tpu.memory_space<vmem>>
      %105 = tpu.memref_squeeze %104 : memref<1x32x128xf32, #tpu.memory_space<vmem>> -> memref<32x128xf32, #tpu.memory_space<vmem>>
      %106 = tpu.memref_slice %arg9[%100] : memref<2x!tpu.dma_semaphore, #tpu.memory_space<semaphore_mem>> -> memref<1x!tpu.dma_semaphore, #tpu.memory_space<semaphore_mem>>
      %107 = tpu.memref_squeeze %106 : memref<1x!tpu.dma_semaphore, #tpu.memory_space<semaphore_mem>> -> memref<!tpu.dma_semaphore, #tpu.memory_space<semaphore_mem>>
      tpu.enqueue_dma source(%103 : memref<32x128xf32, #tpu.memory_space<any>>) target(%105 : memref<32x128xf32, #tpu.memory_space<vmem>>) target_semaphore(%107 : memref<!tpu.dma_semaphore, #tpu.memory_space<semaphore_mem>>)
    } else {
    }
    %15 = arith.index_cast %0 : i32 to index
    %c0 = arith.constant 0 : index
    %c0_5 = arith.constant 0 : index
    %16 = vector.load %arg8[%15, %c0, %c0_5] : memref<2x32x128xf32, #tpu.memory_space<vmem>>, vector<1x32x128xf32>
    %17 = vector.shape_cast %16 : vector<1x32x128xf32> to vector<32x128xf32>
    %cst = arith.constant 0.000000e+00 : f32
    %18 = vector.broadcast %cst : f32 to vector<32x128xf32>
    %19 = arith.cmpf oge, %17, %18 : vector<32x128xf32>
    %cst_6 = arith.constant 1.000000e-01 : f32
    %20 = vector.broadcast %cst_6 : f32 to vector<32x128xf32>
    %21 = arith.mulf %20, %17 : vector<32x128xf32>
    %22 = arith.select %19, %17, %21 : vector<32x128xi1>, vector<32x128xf32>
    %c0_7 = arith.constant 0 : index
    %c0_8 = arith.constant 0 : index
    %23 = vector.load %arg4[%c0_7, %c0_8] : memref<1x128xf32, #tpu.memory_space<vmem>>, vector<1x128xf32>
    %24 = vector.extract_strided_slice %22 {offsets = [6, 0], sizes = [18, 128], strides = [1, 1]} : vector<32x128xf32> to vector<18x128xf32>
    %c0_9 = arith.constant 0 : index
    %c0_10 = arith.constant 0 : index
    %c0_11 = arith.constant 0 : index
    %25 = vector.load %arg3[%c0_9, %c0_10, %c0_11] : memref<3x128x128xf32, #tpu.memory_space<vmem>>, vector<1x128x128xf32>
    %26 = vector.shape_cast %25 : vector<1x128x128xf32> to vector<128x128xf32>
    %cst_12 = arith.constant dense<0.000000e+00> : vector<18x128xf32>
    %27 = tpu.matmul %24, %26, %cst_12 {dimension_numbers = #tpu.dot_dimension_numbers<[1], [0], [0], [1], [0, 0, 1, 1], [], []>} : vector<18x128xf32>, vector<128x128xf32>, vector<18x128xf32> -> vector<18x128xf32>
    %28 = vector.broadcast %23 : vector<1x128xf32> to vector<18x128xf32>
    %29 = arith.addf %28, %27 : vector<18x128xf32>
    %30 = vector.extract_strided_slice %22 {offsets = [7, 0], sizes = [18, 128], strides = [1, 1]} : vector<32x128xf32> to vector<18x128xf32>
    %c1 = arith.constant 1 : index
    %c0_13 = arith.constant 0 : index
    %c0_14 = arith.constant 0 : index
    %31 = vector.load %arg3[%c1, %c0_13, %c0_14] : memref<3x128x128xf32, #tpu.memory_space<vmem>>, vector<1x128x128xf32>
    %32 = vector.shape_cast %31 : vector<1x128x128xf32> to vector<128x128xf32>
    %cst_15 = arith.constant dense<0.000000e+00> : vector<18x128xf32>
    %33 = tpu.matmul %30, %32, %cst_15 {dimension_numbers = #tpu.dot_dimension_numbers<[1], [0], [0], [1], [0, 0, 1, 1], [], []>} : vector<18x128xf32>, vector<128x128xf32>, vector<18x128xf32> -> vector<18x128xf32>
    %34 = arith.addf %29, %33 : vector<18x128xf32>
    %35 = vector.extract_strided_slice %22 {offsets = [8, 0], sizes = [18, 128], strides = [1, 1]} : vector<32x128xf32> to vector<18x128xf32>
    %c2 = arith.constant 2 : index
    %c0_16 = arith.constant 0 : index
    %c0_17 = arith.constant 0 : index
    %36 = vector.load %arg3[%c2, %c0_16, %c0_17] : memref<3x128x128xf32, #tpu.memory_space<vmem>>, vector<1x128x128xf32>
    %37 = vector.shape_cast %36 : vector<1x128x128xf32> to vector<128x128xf32>
    %cst_18 = arith.constant dense<0.000000e+00> : vector<18x128xf32>
    %38 = tpu.matmul %35, %37, %cst_18 {dimension_numbers = #tpu.dot_dimension_numbers<[1], [0], [0], [1], [0, 0, 1, 1], [], []>} : vector<18x128xf32>, vector<128x128xf32>, vector<18x128xf32> -> vector<18x128xf32>
    %39 = arith.addf %34, %38 : vector<18x128xf32>
    %cst_19 = arith.constant 0.000000e+00 : f32
    %40 = vector.broadcast %cst_19 : f32 to vector<18x128xf32>
    %41 = arith.cmpf oge, %39, %40 : vector<18x128xf32>
    %cst_20 = arith.constant 1.000000e-01 : f32
    %42 = vector.broadcast %cst_20 : f32 to vector<18x128xf32>
    %43 = arith.mulf %42, %39 : vector<18x128xf32>
    %44 = arith.select %41, %39, %43 : vector<18x128xi1>, vector<18x128xf32>
    %c16_i32_21 = arith.constant 16 : i32
    %45 = arith.muli %arg1, %c16_i32_21 : i32
    %c1_i32_22 = arith.constant 1 : i32
    %46 = arith.subi %45, %c1_i32_22 : i32
    %47 = tpu.iota {dimensions = array<i32: 0>} : vector<18x1xi32>
    %48 = vector.broadcast %46 : i32 to vector<18x1xi32>
    %49 = arith.addi %48, %47 : vector<18x1xi32>
    %c0_i32_23 = arith.constant 0 : i32
    %50 = vector.broadcast %c0_i32_23 : i32 to vector<18x1xi32>
    %51 = arith.cmpi sge, %49, %50 : vector<18x1xi32>
    %c40_i32 = arith.constant 40 : i32
    %52 = vector.broadcast %c40_i32 : i32 to vector<18x1xi32>
    %53 = arith.cmpi slt, %49, %52 : vector<18x1xi32>
    %54 = arith.andi %51, %53 : vector<18x1xi1>
    %cst_24 = arith.constant 0.000000e+00 : f32
    %55 = vector.shape_cast %54 : vector<18x1xi1> to vector<18x1xi1>
    %56 = vector.broadcast %55 : vector<18x1xi1> to vector<18x128xi1>
    %57 = vector.broadcast %cst_24 : f32 to vector<18x128xf32>
    %58 = arith.select %56, %44, %57 : vector<18x128xi1>, vector<18x128xf32>
    %59 = vector.extract_strided_slice %17 {offsets = [8, 0], sizes = [16, 128], strides = [1, 1]} : vector<32x128xf32> to vector<16x128xf32>
    %c0_25 = arith.constant 0 : index
    %c0_26 = arith.constant 0 : index
    %60 = vector.load %arg6[%c0_25, %c0_26] : memref<1x128xf32, #tpu.memory_space<vmem>>, vector<1x128xf32>
    %61 = vector.broadcast %60 : vector<1x128xf32> to vector<16x128xf32>
    %62 = arith.addf %59, %61 : vector<16x128xf32>
    %c0_27 = arith.constant 0 : index
    %c0_28 = arith.constant 0 : index
    %63 = vector.load %arg10[%c0_27, %c0_28] : memref<16x128xf32, #tpu.memory_space<vmem>>, vector<16x128xf32>
    tpu.vector_store %arg10[%c0_27, %c0_28], %62 {strides = array<i32>} : memref<16x128xf32, #tpu.memory_space<vmem>>, vector<16x128xf32>,
    %c0_29 = arith.constant 0 : index
    %c0_30 = arith.constant 0 : index
    %64 = vector.load %arg10[%c0_29, %c0_30] : memref<16x128xf32, #tpu.memory_space<vmem>>, vector<16x128xf32>
    %65 = vector.extract_strided_slice %58 {offsets = [0, 0], sizes = [16, 128], strides = [1, 1]} : vector<18x128xf32> to vector<16x128xf32>
    %c0_31 = arith.constant 0 : index
    %c0_32 = arith.constant 0 : index
    %c0_33 = arith.constant 0 : index
    %66 = vector.load %arg5[%c0_31, %c0_32, %c0_33] : memref<3x128x128xf32, #tpu.memory_space<vmem>>, vector<1x128x128xf32>
    %67 = vector.shape_cast %66 : vector<1x128x128xf32> to vector<128x128xf32>
    %cst_34 = arith.constant dense<0.000000e+00> : vector<16x128xf32>
    %68 = tpu.matmul %65, %67, %cst_34 {dimension_numbers = #tpu.dot_dimension_numbers<[1], [0], [0], [1], [0, 0, 1, 1], [], []>} : vector<16x128xf32>, vector<128x128xf32>, vector<16x128xf32> -> vector<16x128xf32>
    %69 = arith.addf %64, %68 : vector<16x128xf32>
    %c0_35 = arith.constant 0 : index
    %c0_36 = arith.constant 0 : index
    %70 = vector.load %arg10[%c0_35, %c0_36] : memref<16x128xf32, #tpu.memory_space<vmem>>, vector<16x128xf32>
    tpu.vector_store %arg10[%c0_35, %c0_36], %69 {strides = array<i32>} : memref<16x128xf32, #tpu.memory_space<vmem>>, vector<16x128xf32>,
    %c0_37 = arith.constant 0 : index
    %c0_38 = arith.constant 0 : index
    %71 = vector.load %arg10[%c0_37, %c0_38] : memref<16x128xf32, #tpu.memory_space<vmem>>, vector<16x128xf32>
    %72 = vector.extract_strided_slice %58 {offsets = [1, 0], sizes = [16, 128], strides = [1, 1]} : vector<18x128xf32> to vector<16x128xf32>
    %c1_39 = arith.constant 1 : index
    %c0_40 = arith.constant 0 : index
    %c0_41 = arith.constant 0 : index
    %73 = vector.load %arg5[%c1_39, %c0_40, %c0_41] : memref<3x128x128xf32, #tpu.memory_space<vmem>>, vector<1x128x128xf32>
    %74 = vector.shape_cast %73 : vector<1x128x128xf32> to vector<128x128xf32>
    %cst_42 = arith.constant dense<0.000000e+00> : vector<16x128xf32>
    %75 = tpu.matmul %72, %74, %cst_42 {dimension_numbers = #tpu.dot_dimension_numbers<[1], [0], [0], [1], [0, 0, 1, 1], [], []>} : vector<16x128xf32>, vector<128x128xf32>, vector<16x128xf32> -> vector<16x128xf32>
    %76 = arith.addf %71, %75 : vector<16x128xf32>
    %c0_43 = arith.constant 0 : index
    %c0_44 = arith.constant 0 : index
    %77 = vector.load %arg10[%c0_43, %c0_44] : memref<16x128xf32, #tpu.memory_space<vmem>>, vector<16x128xf32>
    tpu.vector_store %arg10[%c0_43, %c0_44], %76 {strides = array<i32>} : memref<16x128xf32, #tpu.memory_space<vmem>>, vector<16x128xf32>,
    %c0_45 = arith.constant 0 : index
    %c0_46 = arith.constant 0 : index
    %78 = vector.load %arg10[%c0_45, %c0_46] : memref<16x128xf32, #tpu.memory_space<vmem>>, vector<16x128xf32>
    %79 = vector.extract_strided_slice %58 {offsets = [2, 0], sizes = [16, 128], strides = [1, 1]} : vector<18x128xf32> to vector<16x128xf32>
    %c2_47 = arith.constant 2 : index
    %c0_48 = arith.constant 0 : index
    %c0_49 = arith.constant 0 : index
    %80 = vector.load %arg5[%c2_47, %c0_48, %c0_49] : memref<3x128x128xf32, #tpu.memory_space<vmem>>, vector<1x128x128xf32>
    %81 = vector.shape_cast %80 : vector<1x128x128xf32> to vector<128x128xf32>
    %cst_50 = arith.constant dense<0.000000e+00> : vector<16x128xf32>
    %82 = tpu.matmul %79, %81, %cst_50 {dimension_numbers = #tpu.dot_dimension_numbers<[1], [0], [0], [1], [0, 0, 1, 1], [], []>} : vector<16x128xf32>, vector<128x128xf32>, vector<16x128xf32> -> vector<16x128xf32>
    %83 = arith.addf %78, %82 : vector<16x128xf32>
    %c0_51 = arith.constant 0 : index
    %c0_52 = arith.constant 0 : index
    %84 = vector.load %arg10[%c0_51, %c0_52] : memref<16x128xf32, #tpu.memory_space<vmem>>, vector<16x128xf32>
    tpu.vector_store %arg10[%c0_51, %c0_52], %83 {strides = array<i32>} : memref<16x128xf32, #tpu.memory_space<vmem>>, vector<16x128xf32>,
    %c16_i32_53 = arith.constant 16 : i32
    %85 = arith.muli %arg1, %c16_i32_53 : i32
    %86 = tpu.iota {dimensions = array<i32: 0>} : vector<16x1xi32>
    %87 = vector.broadcast %85 : i32 to vector<16x1xi32>
    %88 = arith.addi %87, %86 : vector<16x1xi32>
    %c40_i32_54 = arith.constant 40 : i32
    %89 = vector.broadcast %c40_i32_54 : i32 to vector<16x1xi32>
    %90 = arith.cmpi slt, %88, %89 : vector<16x1xi32>
    %c0_55 = arith.constant 0 : index
    %c0_56 = arith.constant 0 : index
    %91 = vector.load %arg10[%c0_55, %c0_56] : memref<16x128xf32, #tpu.memory_space<vmem>>, vector<16x128xf32>
    %cst_57 = arith.constant 0.000000e+00 : f32
    %92 = vector.shape_cast %90 : vector<16x1xi1> to vector<16x1xi1>
    %93 = vector.broadcast %92 : vector<16x1xi1> to vector<16x128xi1>
    %94 = vector.broadcast %cst_57 : f32 to vector<16x128xf32>
    %95 = arith.select %93, %91, %94 : vector<16x128xi1>, vector<16x128xf32>
    %c0_58 = arith.constant 0 : index
    %c0_59 = arith.constant 0 : index
    %c0_60 = arith.constant 0 : index
    %96 = vector.load %arg7[%c0_58, %c0_59, %c0_60] : memref<1x16x128xf32, #tpu.memory_space<vmem>>, vector<1x16x128xf32>
    %97 = vector.shape_cast %96 : vector<1x16x128xf32> to vector<16x128xf32>
    %98 = vector.shape_cast %95 : vector<16x128xf32> to vector<1x16x128xf32>
    tpu.vector_store %arg7[%c0_58, %c0_59, %c0_60], %98 {strides = array<i32>} : memref<1x16x128xf32, #tpu.memory_space<vmem>>, vector<1x16x128xf32>,
    return
  }
  func.func @transform_1(%arg0: i32, %arg1: i32) -> (i32, i32, i32) {
    %c0_i32 = arith.constant 0 : i32
    %c0_i32_0 = arith.constant 0 : i32
    %c0_i32_1 = arith.constant 0 : i32
    %c0_i32_2 = arith.constant 0 : i32
    return %c0_i32, %c0_i32_0, %c0_i32_1 : i32, i32, i32
  }
  func.func @transform_2(%arg0: i32, %arg1: i32) -> (i32, i32) {
    %c0_i32 = arith.constant 0 : i32
    %c0_i32_0 = arith.constant 0 : i32
    %c0_i32_1 = arith.constant 0 : i32
    return %c0_i32, %c0_i32_0 : i32, i32
  }
  func.func @transform_3(%arg0: i32, %arg1: i32) -> (i32, i32, i32) {
    %c0_i32 = arith.constant 0 : i32
    %c0_i32_0 = arith.constant 0 : i32
    %c0_i32_1 = arith.constant 0 : i32
    %c0_i32_2 = arith.constant 0 : i32
    return %c0_i32, %c0_i32_0, %c0_i32_1 : i32, i32, i32
  }
  func.func @transform_4(%arg0: i32, %arg1: i32) -> (i32, i32) {
    %c0_i32 = arith.constant 0 : i32
    %c0_i32_0 = arith.constant 0 : i32
    %c0_i32_1 = arith.constant 0 : i32
    return %c0_i32, %c0_i32_0 : i32, i32
  }
  func.func @transform_5(%arg0: i32, %arg1: i32) -> (i32, i32, i32) {
    %c0_i32 = arith.constant 0 : i32
    %c0_i32_0 = arith.constant 0 : i32
    return %arg0, %arg1, %c0_i32 : i32, i32, i32
  }
}

</mosaic_0001>

<llo_original>
// kernel: tpu_custom_call.1
$region0: #{tpu_custom_call.1}
  #allocation0 [shape = 'u32[]', space=smem, size = 0x4, offset = 0x4, fixed_abs, tag = 'smem constant byte address 0x4 - core index']
  #allocation1 [shape = 'u32[144,128]{1,0:T(1,128)}', space=vmem, size = 0x12000, scoped, tag = 'internal scratch']
  #allocation2 [shape = 'f32[2,32,128]{2,1,0:T(8,128)}', space=vmem, size = 0x8000, scoped, tag = 'scratch operand']
  #allocation3 [shape = 's32[2]{0}', space=sflag, size = 0x8, scoped, tag = 'scratch operand']
  #allocation4 [shape = 'f32[16,128]{1,0:T(8,128)}', space=vmem, size = 0x2000, scoped, tag = 'scratch operand']
  #allocation11 [shape = 's32[]', space=sflag, size = 0x4, offset = 0, fixed_abs, tag = 'sflag constant byte address 0x0 - dummy sync flag']
  #allocation12 [shape = 's32[]', space=sflag, size = 0x4, offset = 0, fixed_abs, tag = 'sflag constant byte address 0x0 - dummy sync flag']
  #allocation13 [shape = 'u32[]', space=smem, size = 0x4, offset = 0x44, fixed_abs, tag = 'smem constant byte address 0x44 - assertion arg 0']
  #allocation14 [shape = 'u32[]', space=smem, size = 0x4, offset = 0x48, fixed_abs, tag = 'smem constant byte address 0x48 - assertion arg 1']
  #allocation15 [shape = 's32[]', space=sflag, size = 0x4, offset = 0, fixed_abs, tag = 'sflag constant byte address 0x0 - dummy sync flag']
  #allocation16 [shape = 's32[]', space=sflag, size = 0x4, offset = 0, fixed_abs, tag = 'sflag constant byte address 0x0 - dummy sync flag']
  %s0 = inlined_call_operand.hbm [shape: f32[2,64,128], index: 0, kind: input, shape index: {}]
  %s1 = inlined_call_operand.hbm [shape: f32[3,128,128], index: 1, kind: input, shape index: {}]
  %s2 = inlined_call_operand.vmem [shape: f32[1,128], index: 2, kind: input, shape index: {}]
  %s3 = inlined_call_operand.hbm [shape: f32[3,128,128], index: 3, kind: input, shape index: {}]
  %s4 = inlined_call_operand.vmem [shape: f32[1,128], index: 4, kind: input, shape index: {}]
  %s5 = inlined_call_operand.hbm [shape: f32[2,48,128], index: 5, kind: output, shape index: {}]
  %s6 = sld [smem:[#allocation0]]
  $region73: #{tpu_custom_call.1} parent=0
    _
  %s8 = ssub.s32 1, %s6
  %s9 = scalar_select 0, %s8, %s6
  $region1: #{tpu_custom_call.1} parent=0
    #allocation5 [shape = 'u8[196608]{0}', space=vmem, size = 0x30000, scoped, tag = 'input window, operand 1, single buffered']
    #allocation6 [shape = 's32[2]{0}', space=sflag, size = 0x8, scoped, tag = 'scoped memory for tpu_custom_call.1']
    #allocation7 [shape = 's32[2]{0}', space=sflag, size = 0x8, scoped, tag = 'scoped memory for tpu_custom_call.1']
    #allocation8 [shape = 'u8[196608]{0}', space=vmem, size = 0x30000, scoped, tag = 'input window, operand 3, single buffered']
    #allocation9 [shape = 's32[1]{0}', space=sflag, size = 0x4, scoped, tag = 'scoped memory for tpu_custom_call.1']
    #allocation10 [shape = 'u8[16384]{0}', space=vmem, size = 0x4000, scoped, tag = 'output window, operand 0']
    %10 = vsyncpa [#allocation6], 0
    %11 = vsyncpa [#allocation9], 0
    %12 = vsyncpa [#allocation7], 0
    %s13 = scalar_lea.sflag [#allocation7], 1
    %14 = vsyncpa %s13, 0
    loop: start=0, step=1, limit=8
    $region2: #{tpu_custom_call.1} parent=1 // loop_pre_header
      _
    $region3: #{tpu_custom_call.1} parent=1 // loop_header
      %s16 = sphi 0, %s20
      %p17 = scmp.ge.s32.totalorder %s16, 8
      %s23 = sphi 0, %s35
      %s24 = sphi 0, %s31
      %s25 = sphi 0, %s23
      %s26 = sphi 0, %s24
      %s27 = sphi 0, %s25
      %s28 = sphi 0, %s26
      %s36 = sphi 0, %s36
      %s38 = sphi 0, %s36
      %s39 = sphi 0, %s38
      %s53 = sphi 0, %s39
      %s57 = sphi 0, %s57
      %s59 = sphi 0, %s57
      %s60 = sphi 0, %s59
      %s74 = sphi 0, %s60
      %s78 = sphi 0, %s78
      %s80 = sphi 0, %s78
      %s81 = sphi 0, %s80
      %s95 = sphi 0, %s81
      %s99 = sphi 0, %s99
      %s101 = sphi 0, %s99
      %s102 = sphi 0, %s101
      %s116 = sphi 0, %s102
      %s124 = sphi 0, %s126
      %s127 = sphi 0, %s124
      %s128 = sphi 0, %s127
      %s144 = sphi 0, %s128
    $region4: #{tpu_custom_call.1} parent=1 // loop_header_branch
      %19 = sbr.rel (%p17) target = $region8
    $region5: #{tpu_custom_call.1} parent=1 // loop_body
      %s21 = ssub.s32 %s16, 1
      %s22 = ssub.s32 %s16, 2
      %s29 = sadd.s32 1, %s24
      %p30 = scmp.ge.s32.totalorder %s29, 3
      %s31 = scalar_select %p30, 0, %s29
      %s32 = sadd.s32 1, %s23
      %s33 = scalar_select %p30, %s32, %s23
      %p34 = scmp.ge.s32.totalorder %s33, 2
      %s35 = scalar_select %p34, 0, %s33
      %s37 = sadd.s32 %s36, 1
      %p40 = scmp.eq.s32.totalorder %s16, 5
      %p41 = scmp.ne.s32.totalorder %s36, %s38
      %p42 = scmp.eq.s32.totalorder %s16, 0
      %p43 = por %p41, %p42
      %p44 = scmp.ne.s32.totalorder %s36, %s38
      %p45 = scmp.eq.s32.totalorder %s21, 5
      %p46 = por %p44, %p45
      %p47 = scmp.ne.s32.totalorder %s38, %s39
      %p48 = scmp.eq.s32.totalorder %s21, 0
      %p49 = por %p47, %p48
      %p50 = scmp.ne.s32.totalorder %s38, %s39
      %p51 = scmp.eq.s32.totalorder %s22, 5
      %p52 = por %p50, %p51
      %p54 = scmp.ne.s32.totalorder %s39, %s53
      %p55 = scmp.eq.s32.totalorder %s22, 0
      %p56 = por %p54, %p55
      %s58 = sadd.s32 %s57, 1
      %p61 = scmp.eq.s32.totalorder %s16, 5
      %p62 = scmp.ne.s32.totalorder %s57, %s59
      %p63 = scmp.eq.s32.totalorder %s16, 0
      %p64 = por %p62, %p63
      %p65 = scmp.ne.s32.totalorder %s57, %s59
      %p66 = scmp.eq.s32.totalorder %s21, 5
      %p67 = por %p65, %p66
      %p68 = scmp.ne.s32.totalorder %s59, %s60
      %p69 = scmp.eq.s32.totalorder %s21, 0
      %p70 = por %p68, %p69
      %p71 = scmp.ne.s32.totalorder %s59, %s60
      %p72 = scmp.eq.s32.totalorder %s22, 5
      %p73 = por %p71, %p72
      %p75 = scmp.ne.s32.totalorder %s60, %s74
      %p76 = scmp.eq.s32.totalorder %s22, 0
      %p77 = por %p75, %p76
      %s79 = sadd.s32 %s78, 1
      %p82 = scmp.eq.s32.totalorder %s16, 5
      %p83 = scmp.ne.s32.totalorder %s78, %s80
      %p84 = scmp.eq.s32.totalorder %s16, 0
      %p85 = por %p83, %p84
      %p86 = scmp.ne.s32.totalorder %s78, %s80
      %p87 = scmp.eq.s32.totalorder %s21, 5
      %p88 = por %p86, %p87
      %p89 = scmp.ne.s32.totalorder %s80, %s81
      %p90 = scmp.eq.s32.totalorder %s21, 0
      %p91 = por %p89, %p90
      %p92 = scmp.ne.s32.totalorder %s80, %s81
      %p93 = scmp.eq.s32.totalorder %s22, 5
      %p94 = por %p92, %p93
      %p96 = scmp.ne.s32.totalorder %s81, %s95
      %p97 = scmp.eq.s32.totalorder %s22, 0
      %p98 = por %p96, %p97
      %s100 = sadd.s32 %s99, 1
      %p103 = scmp.eq.s32.totalorder %s16, 5
      %p104 = scmp.ne.s32.totalorder %s99, %s101
      %p105 = scmp.eq.s32.totalorder %s16, 0
      %p106 = por %p104, %p105
      %p107 = scmp.ne.s32.totalorder %s99, %s101
      %p108 = scmp.eq.s32.totalorder %s21, 5
      %p109 = por %p107, %p108
      %p110 = scmp.ne.s32.totalorder %s101, %s102
      %p111 = scmp.eq.s32.totalorder %s21, 0
      %p112 = por %p110, %p111
      %p113 = scmp.ne.s32.totalorder %s101, %s102
      %p114 = scmp.eq.s32.totalorder %s22, 5
      %p115 = por %p113, %p114
      %p117 = scmp.ne.s32.totalorder %s102, %s116
      %p118 = scmp.eq.s32.totalorder %s22, 0
      %p119 = por %p117, %p118
      %s120 = ssub.s32 %s23, %s35
      %s121 = ssub.s32 %s24, %s31
      %s122 = sor.u32 %s120, %s121
      %p123 = scmp.eq.s32.totalorder %s122, 0
      %s125 = sadd.s32 %s124, 1
      %s126 = scalar_select %p123, %s124, %s125
      %p129 = pneg %p123
      %p130 = scmp.eq.s32.totalorder %s16, 5
      %p131 = por %p129, %p130
      %p132 = scmp.ne.s32.totalorder %s124, %s127
      %p133 = scmp.eq.s32.totalorder %s16, 0
      %p134 = por %p132, %p133
      %p135 = scmp.ne.s32.totalorder %s124, %s127
      %p136 = scmp.eq.s32.totalorder %s21, 5
      %p137 = por %p135, %p136
      %p138 = scmp.ne.s32.totalorder %s127, %s128
      %p139 = scmp.eq.s32.totalorder %s21, 0
      %p140 = por %p138, %p139
      %p141 = scmp.ne.s32.totalorder %s127, %s128
      %p142 = scmp.eq.s32.totalorder %s22, 5
      %p143 = por %p141, %p142
      %p145 = scmp.ne.s32.totalorder %s128, %s144
      %p146 = scmp.eq.s32.totalorder %s22, 0
      %p147 = por %p145, %p146
      %p148 = scmp.le.s32.totalorder 1, %s16
      %p149 = scmp.lt.s32.totalorder %s16, 7
      %p150 = pnand %p148, %p149
      %p151 = pneg %p150
      // Predicated region
      $region9: #{tpu_custom_call.1} parent=5 // pred_check
        _
      $region10: #{tpu_custom_call.1} parent=5 // pred_check_branch
        %153 = sbr.rel (%p150) target = $region12
      $region11: #{tpu_custom_call.1} parent=5 // pred_region
        %s154 = ssub.s32 %s16, 1
        // Predicated region
        $region13: #{tpu_custom_call.1} parent=11 // pred_check
          %p155 = pneg %p49
        $region14: #{tpu_custom_call.1} parent=11 // pred_check_branch
          %157 = sbr.rel (%p155) target = $region16
        $region15: #{tpu_custom_call.1} parent=11 // pred_region
          %s159 = ssub.s32 6144, 6144
          %160 = vsyncadd [#allocation6], %s159
          %s161 = sshll.u32 [#allocation5], 4
          %s162 = int_to_ptr.vmem [resolvable:$true] %s161
          %167 = dma.hbm_to_vmem [thread:$0]  %s1, 6144, %s162, [#allocation6], 128, 128, 8
        $region16: #{tpu_custom_call.1} parent=11 // pred_fallthru
          _
        // Predicated region
        $region17: #{tpu_custom_call.1} parent=11 // pred_check
          %p168 = pneg %p70
        $region18: #{tpu_custom_call.1} parent=11 // pred_check_branch
          %170 = sbr.rel (%p168) target = $region20
        $region19: #{tpu_custom_call.1} parent=11 // pred_region
          _
        $region20: #{tpu_custom_call.1} parent=11 // pred_fallthru
          _
        // Predicated region
        $region21: #{tpu_custom_call.1} parent=11 // pred_check
          %p171 = pneg %p91
        $region22: #{tpu_custom_call.1} parent=11 // pred_check_branch
          %173 = sbr.rel (%p171) target = $region24
        $region23: #{tpu_custom_call.1} parent=11 // pred_region
          %s175 = ssub.s32 6144, 6144
          %176 = vsyncadd [#allocation9], %s175
          %s177 = sshll.u32 [#allocation8], 4
          %s178 = int_to_ptr.vmem [resolvable:$true] %s177
          %183 = dma.hbm_to_vmem [thread:$0]  %s3, 6144, %s178, [#allocation9], 128, 128, 8
        $region24: #{tpu_custom_call.1} parent=11 // pred_fallthru
          _
        // Predicated region
        $region25: #{tpu_custom_call.1} parent=11 // pred_check
          %p184 = pneg %p112
        $region26: #{tpu_custom_call.1} parent=11 // pred_check_branch
          %186 = sbr.rel (%p184) target = $region28
        $region27: #{tpu_custom_call.1} parent=11 // pred_region
          _
        $region28: #{tpu_custom_call.1} parent=11 // pred_fallthru
          _
      $region12: #{tpu_custom_call.1} parent=5 // pred_fallthru
        _
      %p187 = scmp.lt.s32.totalorder %s16, 6
      // Predicated region
      $region29: #{tpu_custom_call.1} parent=5 // pred_check
        %p188 = pneg %p187
      $region30: #{tpu_custom_call.1} parent=5 // pred_check_branch
        %190 = sbr.rel (%p188) target = $region32
      $region31: #{tpu_custom_call.1} parent=5 // pred_region
        _
      $region32: #{tpu_custom_call.1} parent=5 // pred_fallthru
        _
      %p191 = scmp.le.s32.totalorder 1, %s16
      %p192 = scmp.lt.s32.totalorder %s16, 7
      %p193 = pnand %p191, %p192
      %p194 = pneg %p193
      // Predicated region
      $region33: #{tpu_custom_call.1} parent=5 // pred_check
        _
      $region34: #{tpu_custom_call.1} parent=5 // pred_check_branch
        %196 = sbr.rel (%p193) target = $region36
      $region35: #{tpu_custom_call.1} parent=5 // pred_region
        %s197 = ssub.s32 %s16, 1
        // Predicated region
        $region37: #{tpu_custom_call.1} parent=35 // pred_check
          %p198 = pneg %p49
        $region38: #{tpu_custom_call.1} parent=35 // pred_check_branch
          %200 = sbr.rel (%p198) target = $region40
        $region39: #{tpu_custom_call.1} parent=35 // pred_region
          %201 = dma.done [#allocation6], 6144
        $region40: #{tpu_custom_call.1} parent=35 // pred_fallthru
          _
        // Predicated region
        $region41: #{tpu_custom_call.1} parent=35 // pred_check
          %p202 = pneg %p91
        $region42: #{tpu_custom_call.1} parent=35 // pred_check_branch
          %204 = sbr.rel (%p202) target = $region44
        $region43: #{tpu_custom_call.1} parent=35 // pred_region
          %205 = dma.done [#allocation9], 6144
        $region44: #{tpu_custom_call.1} parent=35 // pred_fallthru
          _
        %p206 = pneg %p49
        %p207 = pneg %p46
        %p208 = pneg %p70
        %p209 = pneg %p67
        %p210 = pneg %p91
        %p211 = pneg %p88
        %p212 = pneg %p112
        %p213 = pneg %p109
        %p214 = pneg %p140
        %p215 = pneg %p137
        %s216 = sand.u32 %s127, 1
        %s217 = scalar_lea.sflag [#allocation7], %s216
        %s218 = sand.u32 %s127, 1
        %s219 = smul.addr %s218, 16
        %s220 = scalar_lea.vmem [#allocation10], %s219
        %s221 = smul.u32 2, %s26
        %p222 = scmp.lt.s32.totalorder %s26, 0
        %s223 = ssub.s32 0, %s26
        %s224 = scalar_select %p222, %s223, %s26
        %s225 = sand.u32 %s224, 1
        %s226 = ssub.s32 0, %s225
        %s227 = scalar_select %p222, %s226, %s225
        %p228 = scmp.eq.s32.totalorder %s26, 0
        // Predicated region
        $region45: #{tpu_custom_call.1} parent=35 // pred_check
          %p229 = pneg %p228
        $region46: #{tpu_custom_call.1} parent=35 // pred_check_branch
          %231 = sbr.rel (%p229) target = $region48
        $region47: #{tpu_custom_call.1} parent=35 // pred_region
          %s232 = smul.u32 %s25, 64
          %s233 = smul.addr %s232, 16
          %s234 = scalar_lea.hbm %s0, %s233
          // Predicated region
          $region49: #{tpu_custom_call.1} parent=47 // pred_check
            _
          $region50: #{tpu_custom_call.1} parent=47 // pred_check_branch
            %236 = sbr.rel target = $region52
          $region51: #{tpu_custom_call.1} parent=47 // pred_region
            %237 = sst [smem:[#allocation13]] [#allocation12]
            %238 = sst [smem:[#allocation14]] [#allocation11]
          $region52: #{tpu_custom_call.1} parent=47 // pred_fallthru
            _
          %240 = shalt.err (0)
          %s242 = sshll.u32 [#allocation2], 4
          %s243 = int_to_ptr.vmem [resolvable:$true] %s242
          %245 = dma.hbm_to_vmem [thread:$0]  %s234, 512, %s243, [#allocation3]
        $region48: #{tpu_custom_call.1} parent=35 // pred_fallthru
          _
        %s246 = smul.u32 %s26, 16
        %s247 = smul.u32 %s227, 32
        %s248 = scalar_lea.vmem [#allocation2], %s247
        %s249 = scalar_lea.sflag [#allocation3], %s227
        %s250 = smul.u32 32, 1
        %s251 = sshll.u32 %s250, 4
        %252 = dma.done %s249, %s251
        %s253 = sadd.s32 %s26, 1
        %p254 = scmp.lt.s32.totalorder %s253, 3
        // Predicated region
        $region53: #{tpu_custom_call.1} parent=35 // pred_check
          %p255 = pneg %p254
        $region54: #{tpu_custom_call.1} parent=35 // pred_check_branch
          %257 = sbr.rel (%p255) target = $region56
        $region55: #{tpu_custom_call.1} parent=35 // pred_region
          %s258 = ssub.s32 1, %s227
          %s259 = smul.u32 %s253, 16
          %s260 = smul.u32 %s25, 64
          %s261 = sadd.s32 %s259, %s260
          %s262 = smul.addr %s261, 16
          %s263 = scalar_lea.hbm %s0, %s262
          %s264 = smul.u32 %s258, 32
          %s265 = scalar_lea.vmem [#allocation2], %s264
          %s266 = scalar_lea.sflag [#allocation3], %s258
          // Predicated region
          $region57: #{tpu_custom_call.1} parent=55 // pred_check
            _
          $region58: #{tpu_custom_call.1} parent=55 // pred_check_branch
            %268 = sbr.rel target = $region60
          $region59: #{tpu_custom_call.1} parent=55 // pred_region
            %269 = sst [smem:[#allocation13]] [#allocation16]
            %270 = sst [smem:[#allocation14]] [#allocation15]
          $region60: #{tpu_custom_call.1} parent=55 // pred_fallthru
            _
          %272 = shalt.err (0)
          %s274 = sshll.u32 %s265, 4
          %s275 = int_to_ptr.vmem [resolvable:$true] %s274
          %277 = dma.hbm_to_vmem [thread:$0]  %s263, 512, %s275, %s266
        $region56: #{tpu_custom_call.1} parent=35 // pred_fallthru
          _
        %v278 = vld [vmem:[%s248] sm:$0xff]
        %v279 = vld [vmem:[%s248 + $0x8] sm:$0xff]
        %v280 = vld [vmem:[%s248 + $0x10] sm:$0xff]
        %v281 = vld [vmem:[%s248 + $0x18] sm:$0xff]
        %vm282 = vcmp.ge.f32.partialorder %v278, 0.0
        %vm283 = vcmp.ge.f32.partialorder %v279, 0.0
        %vm284 = vcmp.ge.f32.partialorder %v280, 0.0
        %vm285 = vcmp.ge.f32.partialorder %v281, 0.0
        %v286 = vmul.f32 %v278, 0.1
        %v287 = vmul.f32 %v279, 0.1
        %v288 = vmul.f32 %v280, 0.1
        %v289 = vmul.f32 %v281, 0.1
        %v290 = vsel %vm282, %v278, %v286
        %v291 = vsel %vm283, %v279, %v287
        %v292 = vsel %vm284, %v280, %v288
        %v293 = vsel %vm285, %v281, %v289
        %v294 = vld [vmem:[%s2] sm:$0x1]
        %v295 = vld [vmem:[#allocation5] sm:$0xff]
        %v296 = vld [vmem:[#allocation5 + $0x8] sm:$0xff]
        %v297 = vld [vmem:[#allocation5 + $0x10] sm:$0xff]
        %v298 = vld [vmem:[#allocation5 + $0x18] sm:$0xff]
        %v299 = vld [vmem:[#allocation5 + $0x20] sm:$0xff]
        %v300 = vld [vmem:[#allocation5 + $0x28] sm:$0xff]
        %v301 = vld [vmem:[#allocation5 + $0x30] sm:$0xff]
        %v302 = vld [vmem:[#allocation5 + $0x38] sm:$0xff]
        %v303 = vld [vmem:[#allocation5 + $0x40] sm:$0xff]
        %v304 = vld [vmem:[#allocation5 + $0x48] sm:$0xff]
        %v305 = vld [vmem:[#allocation5 + $0x50] sm:$0xff]
        %v306 = vld [vmem:[#allocation5 + $0x58] sm:$0xff]
        %v307 = vld [vmem:[#allocation5 + $0x60] sm:$0xff]
        %v308 = vld [vmem:[#allocation5 + $0x68] sm:$0xff]
        %v309 = vld [vmem:[#allocation5 + $0x70] sm:$0xff]
        %v310 = vld [vmem:[#allocation5 + $0x78] sm:$0xff]
        %vm314 = vcmask 1041408
        %v315 = vrot.slane %v290, 6
        %v316 = vrot.slane %v291, 6
        %v317 = vsel %vm314, %v315, %v316
        %v318 = vrot.slane %v292, 6
        %v319 = vsel %vm314, %v316, %v318
        %323 = vmatprep.subr.mxu0 0.0
        %324 = vmatpush1.msra.mxu0 %v295
        %325 = vmatprep.subr.mxu0 0.0
        %326 = vmatpush1.msra.mxu0 %v296
        %327 = vmatprep.subr.mxu0 0.0
        %328 = vmatpush1.msra.mxu0 %v297
        %329 = vmatprep.subr.mxu0 0.0
        %330 = vmatpush1.msra.mxu0 %v298
        %331 = vmatprep.subr.mxu0 0.0
        %332 = vmatpush1.msra.mxu0 %v299
        %333 = vmatprep.subr.mxu0 0.0
        %334 = vmatpush1.msra.mxu0 %v300
        %335 = vmatprep.subr.mxu0 0.0
        %336 = vmatpush1.msra.mxu0 %v301
        %337 = vmatprep.subr.mxu0 0.0
        %338 = vmatpush1.msra.mxu0 %v302
        %339 = vmatprep.subr.mxu0 0.0
        %340 = vmatpush1.msra.mxu0 %v303
        %341 = vmatprep.subr.mxu0 0.0
        %342 = vmatpush1.msra.mxu0 %v304
        %343 = vmatprep.subr.mxu0 0.0
        %344 = vmatpush1.msra.mxu0 %v305
        %345 = vmatprep.subr.mxu0 0.0
        %346 = vmatpush1.msra.mxu0 %v306
        %347 = vmatprep.subr.mxu0 0.0
        %348 = vmatpush1.msra.mxu0 %v307
        %349 = vmatprep.subr.mxu0 0.0
        %350 = vmatpush1.msra.mxu0 %v308
        %351 = vmatprep.subr.mxu0 0.0
        %352 = vmatpush1.msra.mxu0 %v309
        %353 = vmatprep.subr.mxu0 0.0
        %354 = vmatpush1.msra.mxu0 %v310
        %355 = vmatprep.subr.mxu0 0.0
        %356 = vmatpush1.msra.mxu0 0.0
        %357 = vmatprep.subr.mxu0 0.0
        %358 = vmatpush1.msra.mxu0 0.0
        %359 = vmatprep.subr.mxu0 0.0
        %360 = vmatpush1.msra.mxu0 0.0
        %361 = vmatprep.subr.mxu0 0.0
        %362 = vmatpush1.msra.mxu0 0.0
        %363 = vmatprep.subr.mxu0 0.0
        %364 = vmatpush1.msra.mxu0 0.0
        %365 = vmatprep.subr.mxu0 0.0
        %366 = vmatpush1.msra.mxu0 0.0
        %367 = vmatprep.subr.mxu0 0.0
        %368 = vmatpush1.msra.mxu0 0.0
        %369 = vmatprep.subr.mxu0 0.0
        %370 = vmatpush1.msra.mxu0 0.0
        %371 = vmatprep.subr.mxu0 0.0
        %372 = vmatpush1.msra.mxu0 0.0
        %373 = vmatprep.subr.mxu0 0.0
        %374 = vmatpush1.msra.mxu0 0.0
        %375 = vmatprep.subr.mxu0 0.0
        %376 = vmatpush1.msra.mxu0 0.0
        %377 = vmatprep.subr.mxu0 0.0
        %378 = vmatpush1.msra.mxu0 0.0
        %379 = vmatprep.subr.mxu0 0.0
        %380 = vmatpush1.msra.mxu0 0.0
        %381 = vmatprep.subr.mxu0 0.0
        %382 = vmatpush1.msra.mxu0 0.0
        %383 = vmatprep.subr.mxu0 0.0
        %384 = vmatpush1.msra.mxu0 0.0
        %385 = vmatprep.subr.mxu0 0.0
        %386 = vmatpush1.msra.mxu0 0.0
        %387 = vmatprep.mubr.f32.mxu0 0.0
        %388 = vmatmul.mubr.f32.gmra.mrb[0].mxu0 %v317
        %v389 = vpop.f32.mrb[0].mxu0
        %v390 = vadd.f32 0.0, %v389
        %v391 = vpop.f32.mrb[0].mxu0
        %392 = vmatprep.mubr.f32.mxu0 0.0
        %393 = vmatmul.mubr.f32.gmra.mrb[0].mxu0 %v319
        %v394 = vpop.f32.mrb[0].mxu0
        %v395 = vadd.f32 0.0, %v394
        %v396 = vpop.f32.mrb[0].mxu0
        %397 = vmatprep.mubr.f32.mxu0 0.0
        %398 = vmatmul.mubr.f32.gmra.mrb[0].mxu0 %v318
        %v399 = vpop.f32.mrb[0].mxu0
        %v400 = vadd.f32 0.0, %v399
        %v401 = vpop.f32.mrb[0].mxu0
        %402 = vdwg.mxu0
        %v404 = vlaneseq
        %v405 = vshrl.u32 %v404, 7
        %v406 = vsub.s32 0, %v405
        %v407 = vrot.slane %v294, %v406
        %v409 = vadd.f32 %v407, %v390
        %v410 = vadd.f32 %v407, %v395
        %v411 = vadd.f32 %v407, %v400
        %s412 = scalar_lea.vmem [#allocation5], 128
        %v413 = vld [vmem:[%s412] sm:$0xff]
        %v414 = vld [vmem:[%s412 + $0x8] sm:$0xff]
        %v415 = vld [vmem:[%s412 + $0x10] sm:$0xff]
        %v416 = vld [vmem:[%s412 + $0x18] sm:$0xff]
        %v417 = vld [vmem:[%s412 + $0x20] sm:$0xff]
        %v418 = vld [vmem:[%s412 + $0x28] sm:$0xff]
        %v419 = vld [vmem:[%s412 + $0x30] sm:$0xff]
        %v420 = vld [vmem:[%s412 + $0x38] sm:$0xff]
        %v421 = vld [vmem:[%s412 + $0x40] sm:$0xff]
        %v422 = vld [vmem:[%s412 + $0x48] sm:$0xff]
        %v423 = vld [vmem:[%s412 + $0x50] sm:$0xff]
        %v424 = vld [vmem:[%s412 + $0x58] sm:$0xff]
        %v425 = vld [vmem:[%s412 + $0x60] sm:$0xff]
        %v426 = vld [vmem:[%s412 + $0x68] sm:$0xff]
        %v427 = vld [vmem:[%s412 + $0x70] sm:$0xff]
        %v428 = vld [vmem:[%s412 + $0x78] sm:$0xff]
        %vm430 = vcmask 1040384
        %v431 = vrot.slane %v290, 7
        %v432 = vrot.slane %v291, 7
        %v433 = vsel %vm430, %v431, %v432
        %v434 = vrot.slane %v292, 7
        %v435 = vsel %vm430, %v432, %v434
        %v436 = vrot.slane %v293, 7
        %v437 = vsel %vm430, %v434, %v436
        %441 = vmatprep.subr.mxu0 0.0
        %442 = vmatpush1.msra.mxu0 %v413
        %443 = vmatprep.subr.mxu0 0.0
        %444 = vmatpush1.msra.mxu0 %v414
        %445 = vmatprep.subr.mxu0 0.0
        %446 = vmatpush1.msra.mxu0 %v415
        %447 = vmatprep.subr.mxu0 0.0
        %448 = vmatpush1.msra.mxu0 %v416
        %449 = vmatprep.subr.mxu0 0.0
        %450 = vmatpush1.msra.mxu0 %v417
        %451 = vmatprep.subr.mxu0 0.0
        %452 = vmatpush1.msra.mxu0 %v418
        %453 = vmatprep.subr.mxu0 0.0
        %454 = vmatpush1.msra.mxu0 %v419
        %455 = vmatprep.subr.mxu0 0.0
        %456 = vmatpush1.msra.mxu0 %v420
        %457 = vmatprep.subr.mxu0 0.0
        %458 = vmatpush1.msra.mxu0 %v421
        %459 = vmatprep.subr.mxu0 0.0
        %460 = vmatpush1.msra.mxu0 %v422
        %461 = vmatprep.subr.mxu0 0.0
        %462 = vmatpush1.msra.mxu0 %v423
        %463 = vmatprep.subr.mxu0 0.0
        %464 = vmatpush1.msra.mxu0 %v424
        %465 = vmatprep.subr.mxu0 0.0
        %466 = vmatpush1.msra.mxu0 %v425
        %467 = vmatprep.subr.mxu0 0.0
        %468 = vmatpush1.msra.mxu0 %v426
        %469 = vmatprep.subr.mxu0 0.0
        %470 = vmatpush1.msra.mxu0 %v427
        %471 = vmatprep.subr.mxu0 0.0
        %472 = vmatpush1.msra.mxu0 %v428
        %473 = vmatprep.subr.mxu0 0.0
        %474 = vmatpush1.msra.mxu0 0.0
        %475 = vmatprep.subr.mxu0 0.0
        %476 = vmatpush1.msra.mxu0 0.0
        %477 = vmatprep.subr.mxu0 0.0
        %478 = vmatpush1.msra.mxu0 0.0
        %479 = vmatprep.subr.mxu0 0.0
        %480 = vmatpush1.msra.mxu0 0.0
        %481 = vmatprep.subr.mxu0 0.0
        %482 = vmatpush1.msra.mxu0 0.0
        %483 = vmatprep.subr.mxu0 0.0
        %484 = vmatpush1.msra.mxu0 0.0
        %485 = vmatprep.subr.mxu0 0.0
        %486 = vmatpush1.msra.mxu0 0.0
        %487 = vmatprep.subr.mxu0 0.0
        %488 = vmatpush1.msra.mxu0 0.0
        %489 = vmatprep.subr.mxu0 0.0
        %490 = vmatpush1.msra.mxu0 0.0
        %491 = vmatprep.subr.mxu0 0.0
        %492 = vmatpush1.msra.mxu0 0.0
        %493 = vmatprep.subr.mxu0 0.0
        %494 = vmatpush1.msra.mxu0 0.0
        %495 = vmatprep.subr.mxu0 0.0
        %496 = vmatpush1.msra.mxu0 0.0
        %497 = vmatprep.subr.mxu0 0.0
        %498 = vmatpush1.msra.mxu0 0.0
        %499 = vmatprep.subr.mxu0 0.0
        %500 = vmatpush1.msra.mxu0 0.0
        %501 = vmatprep.subr.mxu0 0.0
        %502 = vmatpush1.msra.mxu0 0.0
        %503 = vmatprep.subr.mxu0 0.0
        %504 = vmatpush1.msra.mxu0 0.0
        %505 = vmatprep.mubr.f32.mxu0 0.0
        %506 = vmatmul.mubr.f32.gmra.mrb[0].mxu0 %v433
        %v507 = vpop.f32.mrb[0].mxu0
        %v508 = vadd.f32 0.0, %v507
        %v509 = vpop.f32.mrb[0].mxu0
        %510 = vmatprep.mubr.f32.mxu0 0.0
        %511 = vmatmul.mubr.f32.gmra.mrb[0].mxu0 %v435
        %v512 = vpop.f32.mrb[0].mxu0
        %v513 = vadd.f32 0.0, %v512
        %v514 = vpop.f32.mrb[0].mxu0
        %515 = vmatprep.mubr.f32.mxu0 0.0
        %516 = vmatmul.mubr.f32.gmra.mrb[0].mxu0 %v437
        %v517 = vpop.f32.mrb[0].mxu0
        %v518 = vadd.f32 0.0, %v517
        %v519 = vpop.f32.mrb[0].mxu0
        %520 = vdwg.mxu0
        %v521 = vadd.f32 %v409, %v508
        %v522 = vadd.f32 %v410, %v513
        %v523 = vadd.f32 %v411, %v518
        %s524 = scalar_lea.vmem [#allocation5], 256
        %v525 = vld [vmem:[%s524] sm:$0xff]
        %v526 = vld [vmem:[%s524 + $0x8] sm:$0xff]
        %v527 = vld [vmem:[%s524 + $0x10] sm:$0xff]
        %v528 = vld [vmem:[%s524 + $0x18] sm:$0xff]
        %v529 = vld [vmem:[%s524 + $0x20] sm:$0xff]
        %v530 = vld [vmem:[%s524 + $0x28] sm:$0xff]
        %v531 = vld [vmem:[%s524 + $0x30] sm:$0xff]
        %v532 = vld [vmem:[%s524 + $0x38] sm:$0xff]
        %v533 = vld [vmem:[%s524 + $0x40] sm:$0xff]
        %v534 = vld [vmem:[%s524 + $0x48] sm:$0xff]
        %v535 = vld [vmem:[%s524 + $0x50] sm:$0xff]
        %v536 = vld [vmem:[%s524 + $0x58] sm:$0xff]
        %v537 = vld [vmem:[%s524 + $0x60] sm:$0xff]
        %v538 = vld [vmem:[%s524 + $0x68] sm:$0xff]
        %v539 = vld [vmem:[%s524 + $0x70] sm:$0xff]
        %v540 = vld [vmem:[%s524 + $0x78] sm:$0xff]
        %541 = vmatprep.subr.mxu0 0.0
        %542 = vmatpush1.msra.mxu0 %v525
        %543 = vmatprep.subr.mxu0 0.0
        %544 = vmatpush1.msra.mxu0 %v526
        %545 = vmatprep.subr.mxu0 0.0
        %546 = vmatpush1.msra.mxu0 %v527
        %547 = vmatprep.subr.mxu0 0.0
        %548 = vmatpush1.msra.mxu0 %v528
        %549 = vmatprep.subr.mxu0 0.0
        %550 = vmatpush1.msra.mxu0 %v529
        %551 = vmatprep.subr.mxu0 0.0
        %552 = vmatpush1.msra.mxu0 %v530
        %553 = vmatprep.subr.mxu0 0.0
        %554 = vmatpush1.msra.mxu0 %v531
        %555 = vmatprep.subr.mxu0 0.0
        %556 = vmatpush1.msra.mxu0 %v532
        %557 = vmatprep.subr.mxu0 0.0
        %558 = vmatpush1.msra.mxu0 %v533
        %559 = vmatprep.subr.mxu0 0.0
        %560 = vmatpush1.msra.mxu0 %v534
        %561 = vmatprep.subr.mxu0 0.0
        %562 = vmatpush1.msra.mxu0 %v535
        %563 = vmatprep.subr.mxu0 0.0
        %564 = vmatpush1.msra.mxu0 %v536
        %565 = vmatprep.subr.mxu0 0.0
        %566 = vmatpush1.msra.mxu0 %v537
        %567 = vmatprep.subr.mxu0 0.0
        %568 = vmatpush1.msra.mxu0 %v538
        %569 = vmatprep.subr.mxu0 0.0
        %570 = vmatpush1.msra.mxu0 %v539
        %571 = vmatprep.subr.mxu0 0.0
        %572 = vmatpush1.msra.mxu0 %v540
        %573 = vmatprep.subr.mxu0 0.0
        %574 = vmatpush1.msra.mxu0 0.0
        %575 = vmatprep.subr.mxu0 0.0
        %576 = vmatpush1.msra.mxu0 0.0
        %577 = vmatprep.subr.mxu0 0.0
        %578 = vmatpush1.msra.mxu0 0.0
        %579 = vmatprep.subr.mxu0 0.0
        %580 = vmatpush1.msra.mxu0 0.0
        %581 = vmatprep.subr.mxu0 0.0
        %582 = vmatpush1.msra.mxu0 0.0
        %583 = vmatprep.subr.mxu0 0.0
        %584 = vmatpush1.msra.mxu0 0.0
        %585 = vmatprep.subr.mxu0 0.0
        %586 = vmatpush1.msra.mxu0 0.0
        %587 = vmatprep.subr.mxu0 0.0
        %588 = vmatpush1.msra.mxu0 0.0
        %589 = vmatprep.subr.mxu0 0.0
        %590 = vmatpush1.msra.mxu0 0.0
        %591 = vmatprep.subr.mxu0 0.0
        %592 = vmatpush1.msra.mxu0 0.0
        %593 = vmatprep.subr.mxu0 0.0
        %594 = vmatpush1.msra.mxu0 0.0
        %595 = vmatprep.subr.mxu0 0.0
        %596 = vmatpush1.msra.mxu0 0.0
        %597 = vmatprep.subr.mxu0 0.0
        %598 = vmatpush1.msra.mxu0 0.0
        %599 = vmatprep.subr.mxu0 0.0
        %600 = vmatpush1.msra.mxu0 0.0
        %601 = vmatprep.subr.mxu0 0.0
        %602 = vmatpush1.msra.mxu0 0.0
        %603 = vmatprep.subr.mxu0 0.0
        %604 = vmatpush1.msra.mxu0 0.0
        %605 = vmatprep.mubr.f32.mxu0 0.0
        %606 = vmatmul.mubr.f32.gmra.mrb[0].mxu0 %v291
        %v607 = vpop.f32.mrb[0].mxu0
        %v608 = vadd.f32 0.0, %v607
        %v609 = vpop.f32.mrb[0].mxu0
        %610 = vmatprep.mubr.f32.mxu0 0.0
        %611 = vmatmul.mubr.f32.gmra.mrb[0].mxu0 %v292
        %v612 = vpop.f32.mrb[0].mxu0
        %v613 = vadd.f32 0.0, %v612
        %v614 = vpop.f32.mrb[0].mxu0
        %615 = vmatprep.mubr.f32.mxu0 0.0
        %616 = vmatmul.mubr.f32.gmra.mrb[0].mxu0 %v293
        %v617 = vpop.f32.mrb[0].mxu0
        %v618 = vadd.f32 0.0, %v617
        %v619 = vpop.f32.mrb[0].mxu0
        %620 = vdwg.mxu0
        %v621 = vadd.f32 %v521, %v608
        %v622 = vadd.f32 %v522, %v613
        %v623 = vadd.f32 %v523, %v618
        %vm624 = vcmp.ge.f32.partialorder %v621, 0.0
        %vm625 = vcmp.ge.f32.partialorder %v622, 0.0
        %vm626 = vcmp.ge.f32.partialorder %v623, 0.0
        %v627 = vmul.f32 %v621, 0.1
        %v628 = vmul.f32 %v622, 0.1
        %v629 = vmul.f32 %v623, 0.1
        %v630 = vsel %vm624, %v621, %v627
        %v631 = vsel %vm625, %v622, %v628
        %v632 = vsel %vm626, %v623, %v629
        %s633 = ssub.s32 %s246, 1
        %v634 = vlaneseq
        %v635 = vshrl.u32 %v634, 7
        %v636 = vadd.s32 %v635, 8
        %v637 = vadd.s32 %v635, 16
        %v638 = vstv %s633
        %v639 = vadd.s32 %v638, %v635
        %v640 = vadd.s32 %v638, %v636
        %v641 = vadd.s32 %v638, %v637
        %vm642 = vcmp.ge.s32.totalorder %v639, 0
        %vm643 = vcmp.ge.s32.totalorder %v640, 0
        %vm644 = vcmp.ge.s32.totalorder %v641, 0
        %vm645 = vcmp.lt.s32.totalorder %v639, 40
        %vm646 = vcmp.lt.s32.totalorder %v640, 40
        %vm647 = vcmp.lt.s32.totalorder %v641, 40
        %vm648 = vmand %vm642, %vm645
        %vm649 = vmand %vm643, %vm646
        %vm650 = vmand %vm644, %vm647
        %v651 = vsel %vm648, 1, 0
        %v652 = vsel %vm649, 1, 0
        %v653 = vsel %vm650, 1, 0
        %vm654 = vcmp.eq.s32.totalorder %v651, 1
        %vm655 = vcmp.eq.s32.totalorder %v652, 1
        %vm656 = vcmp.eq.s32.totalorder %v653, 1
        %v657 = vsel %vm654, %v630, 0.0
        %v658 = vsel %vm655, %v631, 0.0
        %v659 = vsel %vm656, %v632, 0.0
        %v660 = vld [vmem:[%s4] sm:$0x1]
        %v662 = vlaneseq
        %v663 = vshrl.u32 %v662, 7
        %v664 = vsub.s32 0, %v663
        %v665 = vrot.slane %v660, %v664
        %v667 = vadd.f32 %v279, %v665
        %v668 = vadd.f32 %v280, %v665
        %669 = vst [vmem:[#allocation4] sm:$0xff] %v667
        %670 = vst [vmem:[#allocation4 + $0x8] sm:$0xff] %v668
        %v671 = vld [vmem:[#allocation4] sm:$0xff]
        %v672 = vld [vmem:[#allocation4 + $0x8] sm:$0xff]
        %v673 = vld [vmem:[#allocation8] sm:$0xff]
        %v674 = vld [vmem:[#allocation8 + $0x8] sm:$0xff]
        %v675 = vld [vmem:[#allocation8 + $0x10] sm:$0xff]
        %v676 = vld [vmem:[#allocation8 + $0x18] sm:$0xff]
        %v677 = vld [vmem:[#allocation8 + $0x20] sm:$0xff]
        %v678 = vld [vmem:[#allocation8 + $0x28] sm:$0xff]
        %v679 = vld [vmem:[#allocation8 + $0x30] sm:$0xff]
        %v680 = vld [vmem:[#allocation8 + $0x38] sm:$0xff]
        %v681 = vld [vmem:[#allocation8 + $0x40] sm:$0xff]
        %v682 = vld [vmem:[#allocation8 + $0x48] sm:$0xff]
        %v683 = vld [vmem:[#allocation8 + $0x50] sm:$0xff]
        %v684 = vld [vmem:[#allocation8 + $0x58] sm:$0xff]
        %v685 = vld [vmem:[#allocation8 + $0x60] sm:$0xff]
        %v686 = vld [vmem:[#allocation8 + $0x68] sm:$0xff]
        %v687 = vld [vmem:[#allocation8 + $0x70] sm:$0xff]
        %v688 = vld [vmem:[#allocation8 + $0x78] sm:$0xff]
        %689 = vmatprep.subr.mxu0 0.0
        %690 = vmatpush1.msra.mxu0 %v673
        %691 = vmatprep.subr.mxu0 0.0
        %692 = vmatpush1.msra.mxu0 %v674
        %693 = vmatprep.subr.mxu0 0.0
        %694 = vmatpush1.msra.mxu0 %v675
        %695 = vmatprep.subr.mxu0 0.0
        %696 = vmatpush1.msra.mxu0 %v676
        %697 = vmatprep.subr.mxu0 0.0
        %698 = vmatpush1.msra.mxu0 %v677
        %699 = vmatprep.subr.mxu0 0.0
        %700 = vmatpush1.msra.mxu0 %v678
        %701 = vmatprep.subr.mxu0 0.0
        %702 = vmatpush1.msra.mxu0 %v679
        %703 = vmatprep.subr.mxu0 0.0
        %704 = vmatpush1.msra.mxu0 %v680
        %705 = vmatprep.subr.mxu0 0.0
        %706 = vmatpush1.msra.mxu0 %v681
        %707 = vmatprep.subr.mxu0 0.0
        %708 = vmatpush1.msra.mxu0 %v682
        %709 = vmatprep.subr.mxu0 0.0
        %710 = vmatpush1.msra.mxu0 %v683
        %711 = vmatprep.subr.mxu0 0.0
        %712 = vmatpush1.msra.mxu0 %v684
        %713 = vmatprep.subr.mxu0 0.0
        %714 = vmatpush1.msra.mxu0 %v685
        %715 = vmatprep.subr.mxu0 0.0
        %716 = vmatpush1.msra.mxu0 %v686
        %717 = vmatprep.subr.mxu0 0.0
        %718 = vmatpush1.msra.mxu0 %v687
        %719 = vmatprep.subr.mxu0 0.0
        %720 = vmatpush1.msra.mxu0 %v688
        %721 = vmatprep.subr.mxu0 0.0
        %722 = vmatpush1.msra.mxu0 0.0
        %723 = vmatprep.subr.mxu0 0.0
        %724 = vmatpush1.msra.mxu0 0.0
        %725 = vmatprep.subr.mxu0 0.0
        %726 = vmatpush1.msra.mxu0 0.0
        %727 = vmatprep.subr.mxu0 0.0
        %728 = vmatpush1.msra.mxu0 0.0
        %729 = vmatprep.subr.mxu0 0.0
        %730 = vmatpush1.msra.mxu0 0.0
        %731 = vmatprep.subr.mxu0 0.0
        %732 = vmatpush1.msra.mxu0 0.0
        %733 = vmatprep.subr.mxu0 0.0
        %734 = vmatpush1.msra.mxu0 0.0
        %735 = vmatprep.subr.mxu0 0.0
        %736 = vmatpush1.msra.mxu0 0.0
        %737 = vmatprep.subr.mxu0 0.0
        %738 = vmatpush1.msra.mxu0 0.0
        %739 = vmatprep.subr.mxu0 0.0
        %740 = vmatpush1.msra.mxu0 0.0
        %741 = vmatprep.subr.mxu0 0.0
        %742 = vmatpush1.msra.mxu0 0.0
        %743 = vmatprep.subr.mxu0 0.0
        %744 = vmatpush1.msra.mxu0 0.0
        %745 = vmatprep.subr.mxu0 0.0
        %746 = vmatpush1.msra.mxu0 0.0
        %747 = vmatprep.subr.mxu0 0.0
        %748 = vmatpush1.msra.mxu0 0.0
        %749 = vmatprep.subr.mxu0 0.0
        %750 = vmatpush1.msra.mxu0 0.0
        %751 = vmatprep.subr.mxu0 0.0
        %752 = vmatpush1.msra.mxu0 0.0
        %753 = vmatprep.mubr.f32.mxu0 0.0
        %754 = vmatmul.mubr.f32.gmra.mrb[0].mxu0 %v657
        %v755 = vpop.f32.mrb[0].mxu0
        %v756 = vadd.f32 0.0, %v755
        %v757 = vpop.f32.mrb[0].mxu0
        %758 = vmatprep.mubr.f32.mxu0 0.0
        %759 = vmatmul.mubr.f32.gmra.mrb[0].mxu0 %v658
        %v760 = vpop.f32.mrb[0].mxu0
        %v761 = vadd.f32 0.0, %v760
        %v762 = vpop.f32.mrb[0].mxu0
        %763 = vdwg.mxu0
        %v764 = vadd.f32 %v671, %v756
        %v765 = vadd.f32 %v672, %v761
        %766 = vst [vmem:[#allocation4] sm:$0xff] %v764
        %767 = vst [vmem:[#allocation4 + $0x8] sm:$0xff] %v765
        %v768 = vld [vmem:[#allocation4] sm:$0xff]
        %v769 = vld [vmem:[#allocation4 + $0x8] sm:$0xff]
        %s770 = scalar_lea.vmem [#allocation8], 128
        %v771 = vld [vmem:[%s770] sm:$0xff]
        %v772 = vld [vmem:[%s770 + $0x8] sm:$0xff]
        %v773 = vld [vmem:[%s770 + $0x10] sm:$0xff]
        %v774 = vld [vmem:[%s770 + $0x18] sm:$0xff]
        %v775 = vld [vmem:[%s770 + $0x20] sm:$0xff]
        %v776 = vld [vmem:[%s770 + $0x28] sm:$0xff]
        %v777 = vld [vmem:[%s770 + $0x30] sm:$0xff]
        %v778 = vld [vmem:[%s770 + $0x38] sm:$0xff]
        %v779 = vld [vmem:[%s770 + $0x40] sm:$0xff]
        %v780 = vld [vmem:[%s770 + $0x48] sm:$0xff]
        %v781 = vld [vmem:[%s770 + $0x50] sm:$0xff]
        %v782 = vld [vmem:[%s770 + $0x58] sm:$0xff]
        %v783 = vld [vmem:[%s770 + $0x60] sm:$0xff]
        %v784 = vld [vmem:[%s770 + $0x68] sm:$0xff]
        %v785 = vld [vmem:[%s770 + $0x70] sm:$0xff]
        %v786 = vld [vmem:[%s770 + $0x78] sm:$0xff]
        %vm790 = vcmask 1046528
        %v791 = vrot.slane %v657, 1
        %v792 = vrot.slane %v658, 1
        %v793 = vsel %vm790, %v791, %v792
        %v794 = vrot.slane %v659, 1
        %v795 = vsel %vm790, %v792, %v794
        %798 = vmatprep.subr.mxu0 0.0
        %799 = vmatpush1.msra.mxu0 %v771
        %800 = vmatprep.subr.mxu0 0.0
        %801 = vmatpush1.msra.mxu0 %v772
        %802 = vmatprep.subr.mxu0 0.0
        %803 = vmatpush1.msra.mxu0 %v773
        %804 = vmatprep.subr.mxu0 0.0
        %805 = vmatpush1.msra.mxu0 %v774
        %806 = vmatprep.subr.mxu0 0.0
        %807 = vmatpush1.msra.mxu0 %v775
        %808 = vmatprep.subr.mxu0 0.0
        %809 = vmatpush1.msra.mxu0 %v776
        %810 = vmatprep.subr.mxu0 0.0
        %811 = vmatpush1.msra.mxu0 %v777
        %812 = vmatprep.subr.mxu0 0.0
        %813 = vmatpush1.msra.mxu0 %v778
        %814 = vmatprep.subr.mxu0 0.0
        %815 = vmatpush1.msra.mxu0 %v779
        %816 = vmatprep.subr.mxu0 0.0
        %817 = vmatpush1.msra.mxu0 %v780
        %818 = vmatprep.subr.mxu0 0.0
        %819 = vmatpush1.msra.mxu0 %v781
        %820 = vmatprep.subr.mxu0 0.0
        %821 = vmatpush1.msra.mxu0 %v782
        %822 = vmatprep.subr.mxu0 0.0
        %823 = vmatpush1.msra.mxu0 %v783
        %824 = vmatprep.subr.mxu0 0.0
        %825 = vmatpush1.msra.mxu0 %v784
        %826 = vmatprep.subr.mxu0 0.0
        %827 = vmatpush1.msra.mxu0 %v785
        %828 = vmatprep.subr.mxu0 0.0
        %829 = vmatpush1.msra.mxu0 %v786
        %830 = vmatprep.subr.mxu0 0.0
        %831 = vmatpush1.msra.mxu0 0.0
        %832 = vmatprep.subr.mxu0 0.0
        %833 = vmatpush1.msra.mxu0 0.0
        %834 = vmatprep.subr.mxu0 0.0
        %835 = vmatpush1.msra.mxu0 0.0
        %836 = vmatprep.subr.mxu0 0.0
        %837 = vmatpush1.msra.mxu0 0.0
        %838 = vmatprep.subr.mxu0 0.0
        %839 = vmatpush1.msra.mxu0 0.0
        %840 = vmatprep.subr.mxu0 0.0
        %841 = vmatpush1.msra.mxu0 0.0
        %842 = vmatprep.subr.mxu0 0.0
        %843 = vmatpush1.msra.mxu0 0.0
        %844 = vmatprep.subr.mxu0 0.0
        %845 = vmatpush1.msra.mxu0 0.0
        %846 = vmatprep.subr.mxu0 0.0
        %847 = vmatpush1.msra.mxu0 0.0
        %848 = vmatprep.subr.mxu0 0.0
        %849 = vmatpush1.msra.mxu0 0.0
        %850 = vmatprep.subr.mxu0 0.0
        %851 = vmatpush1.msra.mxu0 0.0
        %852 = vmatprep.subr.mxu0 0.0
        %853 = vmatpush1.msra.mxu0 0.0
        %854 = vmatprep.subr.mxu0 0.0
        %855 = vmatpush1.msra.mxu0 0.0
        %856 = vmatprep.subr.mxu0 0.0
        %857 = vmatpush1.msra.mxu0 0.0
        %858 = vmatprep.subr.mxu0 0.0
        %859 = vmatpush1.msra.mxu0 0.0
        %860 = vmatprep.subr.mxu0 0.0
        %861 = vmatpush1.msra.mxu0 0.0
        %862 = vmatprep.mubr.f32.mxu0 0.0
        %863 = vmatmul.mubr.f32.gmra.mrb[0].mxu0 %v793
        %v864 = vpop.f32.mrb[0].mxu0
        %v865 = vadd.f32 0.0, %v864
        %v866 = vpop.f32.mrb[0].mxu0
        %867 = vmatprep.mubr.f32.mxu0 0.0
        %868 = vmatmul.mubr.f32.gmra.mrb[0].mxu0 %v795
        %v869 = vpop.f32.mrb[0].mxu0
        %v870 = vadd.f32 0.0, %v869
        %v871 = vpop.f32.mrb[0].mxu0
        %872 = vdwg.mxu0
        %v873 = vadd.f32 %v768, %v865
        %v874 = vadd.f32 %v769, %v870
        %875 = vst [vmem:[#allocation4] sm:$0xff] %v873
        %876 = vst [vmem:[#allocation4 + $0x8] sm:$0xff] %v874
        %v877 = vld [vmem:[#allocation4] sm:$0xff]
        %v878 = vld [vmem:[#allocation4 + $0x8] sm:$0xff]
        %s879 = scalar_lea.vmem [#allocation8], 256
        %v880 = vld [vmem:[%s879] sm:$0xff]
        %v881 = vld [vmem:[%s879 + $0x8] sm:$0xff]
        %v882 = vld [vmem:[%s879 + $0x10] sm:$0xff]
        %v883 = vld [vmem:[%s879 + $0x18] sm:$0xff]
        %v884 = vld [vmem:[%s879 + $0x20] sm:$0xff]
        %v885 = vld [vmem:[%s879 + $0x28] sm:$0xff]
        %v886 = vld [vmem:[%s879 + $0x30] sm:$0xff]
        %v887 = vld [vmem:[%s879 + $0x38] sm:$0xff]
        %v888 = vld [vmem:[%s879 + $0x40] sm:$0xff]
        %v889 = vld [vmem:[%s879 + $0x48] sm:$0xff]
        %v890 = vld [vmem:[%s879 + $0x50] sm:$0xff]
        %v891 = vld [vmem:[%s879 + $0x58] sm:$0xff]
        %v892 = vld [vmem:[%s879 + $0x60] sm:$0xff]
        %v893 = vld [vmem:[%s879 + $0x68] sm:$0xff]
        %v894 = vld [vmem:[%s879 + $0x70] sm:$0xff]
        %v895 = vld [vmem:[%s879 + $0x78] sm:$0xff]
        %vm896 = vcmask 1045504
        %v897 = vrot.slane %v657, 2
        %v898 = vrot.slane %v658, 2
        %v899 = vsel %vm896, %v897, %v898
        %v900 = vrot.slane %v659, 2
        %v901 = vsel %vm896, %v898, %v900
        %904 = vmatprep.subr.mxu0 0.0
        %905 = vmatpush1.msra.mxu0 %v880
        %906 = vmatprep.subr.mxu0 0.0
        %907 = vmatpush1.msra.mxu0 %v881
        %908 = vmatprep.subr.mxu0 0.0
        %909 = vmatpush1.msra.mxu0 %v882
        %910 = vmatprep.subr.mxu0 0.0
        %911 = vmatpush1.msra.mxu0 %v883
        %912 = vmatprep.subr.mxu0 0.0
        %913 = vmatpush1.msra.mxu0 %v884
        %914 = vmatprep.subr.mxu0 0.0
        %915 = vmatpush1.msra.mxu0 %v885
        %916 = vmatprep.subr.mxu0 0.0
        %917 = vmatpush1.msra.mxu0 %v886
        %918 = vmatprep.subr.mxu0 0.0
        %919 = vmatpush1.msra.mxu0 %v887
        %920 = vmatprep.subr.mxu0 0.0
        %921 = vmatpush1.msra.mxu0 %v888
        %922 = vmatprep.subr.mxu0 0.0
        %923 = vmatpush1.msra.mxu0 %v889
        %924 = vmatprep.subr.mxu0 0.0
        %925 = vmatpush1.msra.mxu0 %v890
        %926 = vmatprep.subr.mxu0 0.0
        %927 = vmatpush1.msra.mxu0 %v891
        %928 = vmatprep.subr.mxu0 0.0
        %929 = vmatpush1.msra.mxu0 %v892
        %930 = vmatprep.subr.mxu0 0.0
        %931 = vmatpush1.msra.mxu0 %v893
        %932 = vmatprep.subr.mxu0 0.0
        %933 = vmatpush1.msra.mxu0 %v894
        %934 = vmatprep.subr.mxu0 0.0
        %935 = vmatpush1.msra.mxu0 %v895
        %936 = vmatprep.subr.mxu0 0.0
        %937 = vmatpush1.msra.mxu0 0.0
        %938 = vmatprep.subr.mxu0 0.0
        %939 = vmatpush1.msra.mxu0 0.0
        %940 = vmatprep.subr.mxu0 0.0
        %941 = vmatpush1.msra.mxu0 0.0
        %942 = vmatprep.subr.mxu0 0.0
        %943 = vmatpush1.msra.mxu0 0.0
        %944 = vmatprep.subr.mxu0 0.0
        %945 = vmatpush1.msra.mxu0 0.0
        %946 = vmatprep.subr.mxu0 0.0
        %947 = vmatpush1.msra.mxu0 0.0
        %948 = vmatprep.subr.mxu0 0.0
        %949 = vmatpush1.msra.mxu0 0.0
        %950 = vmatprep.subr.mxu0 0.0
        %951 = vmatpush1.msra.mxu0 0.0
        %952 = vmatprep.subr.mxu0 0.0
        %953 = vmatpush1.msra.mxu0 0.0
        %954 = vmatprep.subr.mxu0 0.0
        %955 = vmatpush1.msra.mxu0 0.0
        %956 = vmatprep.subr.mxu0 0.0
        %957 = vmatpush1.msra.mxu0 0.0
        %958 = vmatprep.subr.mxu0 0.0
        %959 = vmatpush1.msra.mxu0 0.0
        %960 = vmatprep.subr.mxu0 0.0
        %961 = vmatpush1.msra.mxu0 0.0
        %962 = vmatprep.subr.mxu0 0.0
        %963 = vmatpush1.msra.mxu0 0.0
        %964 = vmatprep.subr.mxu0 0.0
        %965 = vmatpush1.msra.mxu0 0.0
        %966 = vmatprep.subr.mxu0 0.0
        %967 = vmatpush1.msra.mxu0 0.0
        %968 = vmatprep.mubr.f32.mxu0 0.0
        %969 = vmatmul.mubr.f32.gmra.mrb[0].mxu0 %v899
        %v970 = vpop.f32.mrb[0].mxu0
        %v971 = vadd.f32 0.0, %v970
        %v972 = vpop.f32.mrb[0].mxu0
        %973 = vmatprep.mubr.f32.mxu0 0.0
        %974 = vmatmul.mubr.f32.gmra.mrb[0].mxu0 %v901
        %v975 = vpop.f32.mrb[0].mxu0
        %v976 = vadd.f32 0.0, %v975
        %v977 = vpop.f32.mrb[0].mxu0
        %978 = vdwg.mxu0
        %v979 = vadd.f32 %v877, %v971
        %v980 = vadd.f32 %v878, %v976
        %981 = vst [vmem:[#allocation4] sm:$0xff] %v979
        %982 = vst [vmem:[#allocation4 + $0x8] sm:$0xff] %v980
        %v983 = vstv %s246
        %v984 = vadd.s32 %v983, %v635
        %v985 = vadd.s32 %v983, %v636
        %vm986 = vcmp.lt.s32.totalorder %v984, 40
        %vm987 = vcmp.lt.s32.totalorder %v985, 40
        %v988 = vld [vmem:[#allocation4] sm:$0xff]
        %v989 = vld [vmem:[#allocation4 + $0x8] sm:$0xff]
        %v990 = vsel %vm986, 1, 0
        %v991 = vsel %vm987, 1, 0
        %vm992 = vcmp.eq.s32.totalorder %v990, 1
        %vm993 = vcmp.eq.s32.totalorder %v991, 1
        %v994 = vsel %vm992, %v988, 0.0
        %v995 = vsel %vm993, %v989, 0.0
        %996 = vst [vmem:[%s220] sm:$0xff] %v994
        %997 = vst [vmem:[%s220 + $0x8] sm:$0xff] %v995
        %s998 = sand.u32 %s127, 1
        %s999 = scalar_lea.sflag [#allocation7], %s998
        %s1000 = sand.u32 %s127, 1
        %s1001 = smul.addr %s1000, 16
        %s1002 = scalar_lea.vmem [#allocation10], %s1001
        // Predicated region
        $region61: #{tpu_custom_call.1} parent=35 // pred_check
          %p1003 = pneg %p137
        $region62: #{tpu_custom_call.1} parent=35 // pred_check_branch
          %1005 = sbr.rel (%p1003) target = $region64
        $region63: #{tpu_custom_call.1} parent=35 // pred_region
          %s1006 = smul.u32 2, %s26
          %s1008 = ssub.s32 256, 256
          %1009 = vsyncadd %s999, %s1008
          %s1010 = smul.addr %s25, 6
          %s1011 = sadd.s32 %s1006, %s1010
          %s1012 = smul.addr %s1011, 128
          %s1013 = scalar_lea.hbm %s5, %s1012
          %s1014 = sshll.u32 %s1002, 4
          %s1015 = int_to_ptr.vmem [resolvable:$true] %s1014
          %1020 = dma.vmem_to_hbm [thread:$0]  %s1015, 256, %s1013, %s999, 128, 128, 8
        $region64: #{tpu_custom_call.1} parent=35 // pred_fallthru
          _
      $region36: #{tpu_custom_call.1} parent=5 // pred_fallthru
        _
      %p1021 = scmp.le.s32.totalorder 2, %s16
      // Predicated region
      $region65: #{tpu_custom_call.1} parent=5 // pred_check
        %p1022 = pneg %p1021
      $region66: #{tpu_custom_call.1} parent=5 // pred_check_branch
        %1024 = sbr.rel (%p1022) target = $region68
      $region67: #{tpu_custom_call.1} parent=5 // pred_region
        %s1025 = ssub.s32 %s16, 2
        // Predicated region
        $region69: #{tpu_custom_call.1} parent=67 // pred_check
          %p1026 = pneg %p143
        $region70: #{tpu_custom_call.1} parent=67 // pred_check_branch
          %1028 = sbr.rel (%p1026) target = $region72
        $region71: #{tpu_custom_call.1} parent=67 // pred_region
          %s1029 = sand.u32 %s128, 1
          %s1030 = scalar_lea.sflag [#allocation7], %s1029
          %s1031 = sand.u32 %s128, 1
          %s1032 = smul.addr %s1031, 16
          %s1033 = scalar_lea.vmem [#allocation10], %s1032
          %1034 = dma.done %s1030, 256
        $region72: #{tpu_custom_call.1} parent=67 // pred_fallthru
          _
      $region68: #{tpu_custom_call.1} parent=5 // pred_fallthru
        _
    $region6: #{tpu_custom_call.1} parent=1 // loop_footer
      %s20 = sadd.s32 1, %s16
    $region7: #{tpu_custom_call.1} parent=1 // loop_footer_branch
      %15 = sbr.rel target = $region3
    $region8: #{tpu_custom_call.1} parent=1 // loop_exit
      _
    %1035 = vsyncpa [#allocation6], 1
    %s1036 = scalar_lea.sflag [#allocation6], 1
    %1037 = vsyncpa %s1036, 1
    %1038 = vsyncpa [#allocation9], 1
    %1039 = vsyncpa [#allocation7], 1
    %s1040 = scalar_lea.sflag [#allocation7], 1
    %1041 = vsyncpa %s1040, 1
  %1042 = vsyncmov [#allocation3]
  %s1043 = vpop.sfrf %1042
  %p1044 = scmp.eq.s32.totalorder %s1043, 0
  %p1045 = pneg %p1044
  %1047 = shalt.err (%p1045)
  %s1048 = scalar_lea.sflag [#allocation3], 1
  %1049 = vsyncmov %s1048
  %s1050 = vpop.sfrf %1049
  %p1051 = scmp.eq.s32.totalorder %s1050, 0
  %p1052 = pneg %p1051
  %1054 = shalt.err (%p1052)

</llo_original>
